<compile_context>
chip_gen: v7x
topology: tpu7x:2x2x1
jax: 0.10.0
libtpu: 0.0.40
codegen_flags: <defaults>
</compile_context>

<pallas_src>
import functools

import jax
import jax.numpy as jnp
from jax.experimental import pallas as pl
from jax.experimental.pallas import tpu as pltpu

LANE = 128
_VMEM_CAP = 64 * 1024 * 1024           # conservative per-TensorCore VMEM (v7x); v5e/v6e have 128 MiB
_TILE_BUDGET = int(_VMEM_CAP * 0.70)   # budget for double-buffered tiles + weights + scratch
_VMEM_LIMIT = int(_VMEM_CAP * 0.90)    # explicit scoped-VMEM limit (~10% headroom for Mosaic scratch)


def _round_up(x, m):
    return ((x + m - 1) // m) * m


def dynamic_conv_kernel(r_ref, we_ref, x_ref, o_ref, w_ref, *,
                        block_b, num_experts, in_ch, use_mxu, compute_dtype):
    """One (block_b, C, THW) -> (block_b, O, THW) tile of the dynamic 1x1 conv.

    r_ref : SMEM (b_pad * E,) fp32   routing weights (sigmoid already applied), scalar reads
    we_ref: VMEM (E, O, C)           expert 1x1-conv weights (grid-invariant)
    x_ref : VMEM (block_b, C, THW)   input tile (THW lane-dense, zero-padded past true H*W)
    o_ref : VMEM (block_b, O, THW)   output tile
    w_ref : VMEM (block_b, O, C) f32 persistent scratch: per-sample mixed weights
    """
    b_i = pl.program_id(0)

    # Mix expert weights only on the first spatial step of each batch block; the scratch
    # persists across the inner ("arbitrary") spatial grid axis and is reused afterwards.
    @pl.when(pl.program_id(1) == 0)
    def _mix():
        we = we_ref[...].astype(jnp.float32)              # (E, O, C)
        for bb in range(block_b):                         # small & static -> unrolled
            base = (b_i * block_b + bb) * num_experts
            w = r_ref[base + 0] * we[0]                   # SMEM scalar * (O, C) vregs
            for e in range(1, num_experts):
                w = w + r_ref[base + e] * we[e]
            w_ref[bb] = w

    x = x_ref[...]                                        # (block_b, C, THW)
    w = w_ref[...]                                        # (block_b, O, C) fp32

    if use_mxu:
        # Batched MXU matmul, fp32 accumulation (bf16 inputs / opt-in bf16 compute supported).
        out = jnp.einsum("boc,bcl->bol",
                         w.astype(compute_dtype), x.astype(compute_dtype),
                         preferred_element_type=jnp.float32)
    else:
        # Genuinely tiny channel counts (fp32 only): O*C VPU FMAs on resident vregs.
        xf = x.astype(jnp.float32)
        out = w[:, :, 0:1] * xf[:, 0:1, :]                # (block_b, O, THW)
        for c in range(1, in_ch):
            out = out + w[:, :, c:c + 1] * xf[:, c:c + 1, :]

    o_ref[...] = out.astype(o_ref.dtype)


def dynamic_conv(x, wr, br, we, *, block_b=None, block_hw=None, compute_in_bf16=False):
    """x: (B, C, H, W) NCHW; wr: (E, C); br: (E,); we: (E, O, C). Returns (B, O, H, W)."""
    B, C, H, W = x.shape
    E, O, Ci = we.shape
    assert Ci == C and wr.shape == (E, C) and br.shape == (E,)
    HW = H * W

    # ---- routing: mean over TRUE spatial extent -> Linear -> sigmoid (tiny, plain XLA) ----
    pooled = jnp.mean(x.astype(jnp.float32), axis=(2, 3))                    # (B, C)
    routing = jax.nn.sigmoid(pooled @ wr.astype(jnp.float32).T
                             + br.astype(jnp.float32))                       # (B, E)

    # ---- VMEM-budget-driven tile selection ----
    x_bytes = jnp.dtype(x.dtype).itemsize
    we_bytes = jnp.dtype(we.dtype).itemsize
    fixed = 2 * E * O * C * we_bytes               # expert weights (double-buffered by pipeline)

    def tile_cost(bb, bhw):
        stream = 2 * bb * bhw * (C + O) * x_bytes  # double-buffered input + output tiles
        return fixed + stream + bb * O * C * 4     # + fp32 mixed-weight scratch

    hw_aligned = _round_up(HW, LANE)

    # Batch tile. The mixed-weight hoist makes the spatial axis "arbitrary" (not megacore-
    # shardable), so keep >=2 batch blocks when B > 1 to feed v7x's second TensorCore
    # (costs only ~0.35us per extra grid step on single-core parts).
    if block_b is None:
        block_b = min(B, 8)
        if B > 1:
            block_b = min(block_b, max(1, (B + 1) // 2))
    while block_b > 1 and tile_cost(block_b, LANE) > _TILE_BUDGET:
        block_b //= 2
    b_pad = _round_up(B, block_b)

    # Spatial tile: largest lane-dense multiple of 128 that fits the budget.
    if block_hw is None:
        avail = max(_TILE_BUDGET - fixed - block_b * O * C * 4, 0)
        per_elem = 2 * block_b * (C + O) * x_bytes
        block_hw = max(LANE, (avail // max(per_elem, 1)) // LANE * LANE)
    block_hw = min(_round_up(block_hw, LANE), hw_aligned)
    hw_pad = _round_up(HW, block_hw)

    # ---- pad & flatten (padding is zeros -> padded outputs are sliced away) ----
    xf = x.reshape(B, C, HW)
    if hw_pad != HW or b_pad != B:
        xf = jnp.pad(xf, ((0, b_pad - B), (0, 0), (0, hw_pad - HW)))
    if b_pad != B:
        routing = jnp.pad(routing, ((0, b_pad - B), (0, 0)))
    routing_flat = routing.reshape(b_pad * E).astype(jnp.float32)   # 1D -> compact SMEM footprint

    grid = (b_pad // block_b, hw_pad // block_hw)

    # MXU for anything but genuinely tiny channel counts; bf16 inputs never take the VPU path.
    use_mxu = (C >= 8) or (O * C >= 128) or (x.dtype != jnp.float32)
    if compute_in_bf16 and x.dtype == jnp.float32:
        compute_dtype = jnp.bfloat16     # opt-in: ~4x MXU throughput, fp32 accumulation
    else:
        compute_dtype = x.dtype

    kernel = functools.partial(
        dynamic_conv_kernel,
        block_b=block_b, num_experts=E, in_ch=C,
        use_mxu=use_mxu, compute_dtype=compute_dtype)

    out = pl.pallas_call(
        kernel,
        out_shape=jax.ShapeDtypeStruct((b_pad, O, hw_pad), x.dtype),
        grid_spec=pltpu.PrefetchScalarGridSpec(
            num_scalar_prefetch=0,
            grid=grid,
            in_specs=[
                pl.BlockSpec(memory_space=pltpu.MemorySpace.SMEM),           # routing (flat, fp32)
                pl.BlockSpec((E, O, C), lambda b, h: (0, 0, 0)),             # expert weights
                pl.BlockSpec((block_b, C, block_hw), lambda b, h: (b, 0, h)),
            ],
            out_specs=pl.BlockSpec((block_b, O, block_hw), lambda b, h: (b, 0, h)),
            scratch_shapes=[pltpu.VMEM((block_b, O, C), jnp.float32)],
        ),
        compiler_params=pltpu.CompilerParams(
            dimension_semantics=("parallel", "arbitrary"),
            vmem_limit_bytes=_VMEM_LIMIT),
    )(routing_flat, we, xf)

    return out[:B, :, :HW].reshape(B, O, H, W)


def dynamic_conv_reference(x, wr, br, we):
    """Pure-JAX reference matching the PyTorch forward semantics."""
    pooled = x.mean(axis=(2, 3))                              # (B, C)
    routing = jax.nn.sigmoid(pooled @ wr.T + br)              # (B, E)
    w_b = jnp.einsum("be,eoi->boi", routing, we)              # (B, O, C)
    return jnp.einsum("boi,bihw->bohw", w_b, x)               # (B, O, H, W)


if __name__ == "__main__":
    key = jax.random.PRNGKey(0)
    k_x, k_wr, k_br, k_we = jax.random.split(key, 4)

    B, C_in, H, W = 2, 4, 16, 16
    C_out, E = 8, 4   # out_features=8, num_experts=4, kernel_size=1, groups=1, bias=False

    x = jax.random.normal(k_x, (B, C_in, H, W), dtype=jnp.float32)
    # routing = nn.Linear(in_features, num_experts): weight (E, C_in), bias (E,)
    wr = jax.random.normal(k_wr, (E, C_in), dtype=jnp.float32) * 0.1
    br = jax.random.normal(k_br, (E,), dtype=jnp.float32) * 0.1
    # CondConv2d expert weights: (E, out * (in//groups) * 1 * 1) viewed as (E, O, C_in)
    we = jax.random.normal(k_we, (E, C_out, C_in), dtype=jnp.float32) * 0.1

    out = dynamic_conv(x, wr, br, we)
    out = jax.block_until_ready(out)

    ref = dynamic_conv_reference(x, wr, br, we)
    if not jnp.allclose(out, ref, atol=1e-5, rtol=1e-5):
        raise AssertionError("Pallas DynamicConv does not match reference")

    print("KERNEL_OK")
</pallas_src>

<mosaic_0001>
module attributes {stable_mosaic.version = 11 : i64} {
  func.func @dynamic_conv_kernel(%arg0: i32, %arg1: i32, %arg2: memref<8xf32, #tpu.memory_space<smem>>, %arg3: memref<4x8x4xf32, #tpu.memory_space<vmem>>, %arg4: memref<1x4x256xf32, #tpu.memory_space<vmem>>, %arg5: memref<1x8x256xf32, #tpu.memory_space<vmem>>, %arg6: memref<1x8x4xf32, #tpu.memory_space<vmem>>) attributes {dimension_semantics = [#tpu.dimension_semantics<parallel>, #tpu.dimension_semantics<arbitrary>], iteration_bounds = array<i64: 2, 1>, scalar_prefetch = 0 : i64, scratch_operands = 1 : i64, tpu.core_type = #tpu.core_type<tc>, window_params = [{transform_indices = @transform_0, window_bounds = array<i64: 8>}, {pipeline_mode = #tpu.pipeline_mode<synchronous>, transform_indices = @transform_1, window_bounds = array<i64: 4, 8, 4>}, {transform_indices = @transform_2, window_bounds = array<i64: 1, 4, 256>}, {transform_indices = @transform_3, window_bounds = array<i64: 1, 8, 256>}]} {
    %c0_i32 = arith.constant 0 : i32
    %0 = arith.cmpi eq, %arg1, %c0_i32 : i32
    %1 = arith.extui %0 : i1 to i32
    %c0_i32_0 = arith.constant 0 : i32
    %2 = arith.cmpi ne, %1, %c0_i32_0 : i32
    scf.if %2 {
      %c0_9 = arith.constant 0 : index
      %c0_10 = arith.constant 0 : index
      %c0_11 = arith.constant 0 : index
      %29 = vector.load %arg3[%c0_9, %c0_10, %c0_11] : memref<4x8x4xf32, #tpu.memory_space<vmem>>, vector<4x8x4xf32>
      %c1_i32 = arith.constant 1 : i32
      %30 = arith.muli %arg0, %c1_i32 : i32
      %c0_i32_12 = arith.constant 0 : i32
      %31 = arith.addi %30, %c0_i32_12 : i32
      %c4_i32 = arith.constant 4 : i32
      %32 = arith.muli %31, %c4_i32 : i32
      %c0_i32_13 = arith.constant 0 : i32
      %33 = arith.addi %32, %c0_i32_13 : i32
      %34 = arith.index_cast %33 : i32 to index
      %35 = memref.load %arg2[%34] : memref<8xf32, #tpu.memory_space<smem>>
      %36 = vector.extract_strided_slice %29 {offsets = [0, 0, 0], sizes = [1, 8, 4], strides = [1, 1, 1]} : vector<4x8x4xf32> to vector<1x8x4xf32>
      %37 = vector.shape_cast %36 : vector<1x8x4xf32> to vector<8x4xf32>
      %38 = vector.broadcast %35 : f32 to vector<8x4xf32>
      %39 = arith.mulf %38, %37 : vector<8x4xf32>
      %c1_i32_14 = arith.constant 1 : i32
      %40 = arith.addi %32, %c1_i32_14 : i32
      %41 = arith.index_cast %40 : i32 to index
      %42 = memref.load %arg2[%41] : memref<8xf32, #tpu.memory_space<smem>>
      %43 = vector.extract_strided_slice %29 {offsets = [1, 0, 0], sizes = [1, 8, 4], strides = [1, 1, 1]} : vector<4x8x4xf32> to vector<1x8x4xf32>
      %44 = vector.shape_cast %43 : vector<1x8x4xf32> to vector<8x4xf32>
      %45 = vector.broadcast %42 : f32 to vector<8x4xf32>
      %46 = arith.mulf %45, %44 : vector<8x4xf32>
      %47 = arith.addf %39, %46 : vector<8x4xf32>
      %c2_i32 = arith.constant 2 : i32
      %48 = arith.addi %32, %c2_i32 : i32
      %49 = arith.index_cast %48 : i32 to index
      %50 = memref.load %arg2[%49] : memref<8xf32, #tpu.memory_space<smem>>
      %51 = vector.extract_strided_slice %29 {offsets = [2, 0, 0], sizes = [1, 8, 4], strides = [1, 1, 1]} : vector<4x8x4xf32> to vector<1x8x4xf32>
      %52 = vector.shape_cast %51 : vector<1x8x4xf32> to vector<8x4xf32>
      %53 = vector.broadcast %50 : f32 to vector<8x4xf32>
      %54 = arith.mulf %53, %52 : vector<8x4xf32>
      %55 = arith.addf %47, %54 : vector<8x4xf32>
      %c3_i32 = arith.constant 3 : i32
      %56 = arith.addi %32, %c3_i32 : i32
      %57 = arith.index_cast %56 : i32 to index
      %58 = memref.load %arg2[%57] : memref<8xf32, #tpu.memory_space<smem>>
      %59 = vector.extract_strided_slice %29 {offsets = [3, 0, 0], sizes = [1, 8, 4], strides = [1, 1, 1]} : vector<4x8x4xf32> to vector<1x8x4xf32>
      %60 = vector.shape_cast %59 : vector<1x8x4xf32> to vector<8x4xf32>
      %61 = vector.broadcast %58 : f32 to vector<8x4xf32>
      %62 = arith.mulf %61, %60 : vector<8x4xf32>
      %63 = arith.addf %55, %62 : vector<8x4xf32>
      %c0_15 = arith.constant 0 : index
      %c0_16 = arith.constant 0 : index
      %c0_17 = arith.constant 0 : index
      %64 = vector.load %arg6[%c0_15, %c0_16, %c0_17] : memref<1x8x4xf32, #tpu.memory_space<vmem>>, vector<1x8x4xf32>
      %65 = vector.shape_cast %64 : vector<1x8x4xf32> to vector<8x4xf32>
      %66 = vector.shape_cast %63 : vector<8x4xf32> to vector<1x8x4xf32>
      tpu.vector_store %arg6[%c0_15, %c0_16, %c0_17], %66 {strides = array<i32>} : memref<1x8x4xf32, #tpu.memory_space<vmem>>, vector<1x8x4xf32>,
    } else {
    }
    %c0 = arith.constant 0 : index
    %c0_1 = arith.constant 0 : index
    %c0_2 = arith.constant 0 : index
    %3 = vector.load %arg4[%c0, %c0_1, %c0_2] : memref<1x4x256xf32, #tpu.memory_space<vmem>>, vector<1x4x256xf32>
    %c0_3 = arith.constant 0 : index
    %c0_4 = arith.constant 0 : index
    %c0_5 = arith.constant 0 : index
    %4 = vector.load %arg6[%c0_3, %c0_4, %c0_5] : memref<1x8x4xf32, #tpu.memory_space<vmem>>, vector<1x8x4xf32>
    %5 = vector.extract_strided_slice %4 {offsets = [0, 0, 0], sizes = [1, 8, 1], strides = [1, 1, 1]} : vector<1x8x4xf32> to vector<1x8x1xf32>
    %6 = vector.extract_strided_slice %3 {offsets = [0, 0, 0], sizes = [1, 1, 256], strides = [1, 1, 1]} : vector<1x4x256xf32> to vector<1x1x256xf32>
    %7 = vector.broadcast %5 : vector<1x8x1xf32> to vector<1x8x256xf32>
    %8 = vector.broadcast %6 : vector<1x1x256xf32> to vector<1x8x256xf32>
    %9 = arith.mulf %7, %8 : vector<1x8x256xf32>
    %10 = vector.extract_strided_slice %4 {offsets = [0, 0, 1], sizes = [1, 8, 1], strides = [1, 1, 1]} : vector<1x8x4xf32> to vector<1x8x1xf32>
    %11 = vector.extract_strided_slice %3 {offsets = [0, 1, 0], sizes = [1, 1, 256], strides = [1, 1, 1]} : vector<1x4x256xf32> to vector<1x1x256xf32>
    %12 = vector.broadcast %10 : vector<1x8x1xf32> to vector<1x8x256xf32>
    %13 = vector.broadcast %11 : vector<1x1x256xf32> to vector<1x8x256xf32>
    %14 = arith.mulf %12, %13 : vector<1x8x256xf32>
    %15 = arith.addf %9, %14 : vector<1x8x256xf32>
    %16 = vector.extract_strided_slice %4 {offsets = [0, 0, 2], sizes = [1, 8, 1], strides = [1, 1, 1]} : vector<1x8x4xf32> to vector<1x8x1xf32>
    %17 = vector.extract_strided_slice %3 {offsets = [0, 2, 0], sizes = [1, 1, 256], strides = [1, 1, 1]} : vector<1x4x256xf32> to vector<1x1x256xf32>
    %18 = vector.broadcast %16 : vector<1x8x1xf32> to vector<1x8x256xf32>
    %19 = vector.broadcast %17 : vector<1x1x256xf32> to vector<1x8x256xf32>
    %20 = arith.mulf %18, %19 : vector<1x8x256xf32>
    %21 = arith.addf %15, %20 : vector<1x8x256xf32>
    %22 = vector.extract_strided_slice %4 {offsets = [0, 0, 3], sizes = [1, 8, 1], strides = [1, 1, 1]} : vector<1x8x4xf32> to vector<1x8x1xf32>
    %23 = vector.extract_strided_slice %3 {offsets = [0, 3, 0], sizes = [1, 1, 256], strides = [1, 1, 1]} : vector<1x4x256xf32> to vector<1x1x256xf32>
    %24 = vector.broadcast %22 : vector<1x8x1xf32> to vector<1x8x256xf32>
    %25 = vector.broadcast %23 : vector<1x1x256xf32> to vector<1x8x256xf32>
    %26 = arith.mulf %24, %25 : vector<1x8x256xf32>
    %27 = arith.addf %21, %26 : vector<1x8x256xf32>
    %c0_6 = arith.constant 0 : index
    %c0_7 = arith.constant 0 : index
    %c0_8 = arith.constant 0 : index
    %28 = vector.load %arg5[%c0_6, %c0_7, %c0_8] : memref<1x8x256xf32, #tpu.memory_space<vmem>>, vector<1x8x256xf32>
    tpu.vector_store %arg5[%c0_6, %c0_7, %c0_8], %27 {strides = array<i32>} : memref<1x8x256xf32, #tpu.memory_space<vmem>>, vector<1x8x256xf32>,
    return
  }
  func.func @transform_0(%arg0: i32, %arg1: i32) -> i32 {
    %c0_i32 = arith.constant 0 : i32
    %c0_i32_0 = arith.constant 0 : i32
    return %c0_i32 : i32
  }
  func.func @transform_1(%arg0: i32, %arg1: i32) -> (i32, i32, i32) {
    %c0_i32 = arith.constant 0 : i32
    %c0_i32_0 = arith.constant 0 : i32
    %c0_i32_1 = arith.constant 0 : i32
    %c0_i32_2 = arith.constant 0 : i32
    return %c0_i32, %c0_i32_0, %c0_i32_1 : i32, i32, i32
  }
  func.func @transform_2(%arg0: i32, %arg1: i32) -> (i32, i32, i32) {
    %c0_i32 = arith.constant 0 : i32
    %c0_i32_0 = arith.constant 0 : i32
    return %arg0, %c0_i32, %arg1 : i32, i32, i32
  }
  func.func @transform_3(%arg0: i32, %arg1: i32) -> (i32, i32, i32) {
    %c0_i32 = arith.constant 0 : i32
    %c0_i32_0 = arith.constant 0 : i32
    return %arg0, %c0_i32, %arg1 : i32, i32, i32
  }
}

</mosaic_0001>

<llo_original>
// kernel: tpu_custom_call.1
$region0: #{tpu_custom_call.1}
  #allocation0 [shape = 'u32[]', space=smem, size = 0x4, offset = 0x4, fixed_abs, tag = 'smem constant byte address 0x4 - core index']
  #allocation1 [shape = 'u32[144,128]{1,0:T(1,128)}', space=vmem, size = 0x12000, scoped, tag = 'internal scratch']
  #allocation2 [shape = 'f32[1,8,4]{2,1,0:T(8,128)}', space=vmem, size = 0x1000, scoped, tag = 'scratch operand']
  %s0 = inlined_call_operand.vmem [shape: f32[8], index: 0, kind: input, shape index: {}]
  %s1 = inlined_call_operand.vmem [shape: f32[4,8,4], index: 1, kind: input, shape index: {}]
  %s2 = inlined_call_operand.vmem [shape: f32[2,4,256], index: 2, kind: input, shape index: {}]
  %s3 = inlined_call_operand.hbm [shape: f32[2,8,256], index: 3, kind: output, shape index: {}]
  %s4 = sld [smem:[#allocation0]]
  $region53: #{tpu_custom_call.1} parent=0
    _
  %s6 = ssub.s32 1, %s4
  %s7 = scalar_select 0, %s6, %s4
  $region1: #{tpu_custom_call.1} parent=0
    #allocation3 [shape = 'u8[512]{0}', space=smem, size = 0x200, scoped, tag = 'input window, operand 0, single buffered']
    #allocation4 [shape = 's32[2]{0}', space=sflag, size = 0x8, scoped, tag = 'scoped memory for tpu_custom_call.1']
    #allocation5 [shape = 's32[2]{0}', space=sflag, size = 0x8, scoped, tag = 'scoped memory for tpu_custom_call.1']
    #allocation6 [shape = 'u8[16384]{0}', space=vmem, size = 0x4000, scoped, tag = 'output window, operand 0']
    %8 = vsyncpa [#allocation5], 0
    %9 = vsyncpa [#allocation4], 0
    %s10 = scalar_lea.sflag [#allocation4], 1
    %11 = vsyncpa %s10, 0
    loop: start=0, step=1, limit=4
    $region2: #{tpu_custom_call.1} parent=1 // loop_pre_header
      _
    $region3: #{tpu_custom_call.1} parent=1 // loop_header
      %s13 = sphi 0, %s17
      %p14 = scmp.ge.s32.totalorder %s13, 4
      %s20 = sphi 0, %s32
      %s21 = sphi 0, %s28
      %s22 = sphi 0, %s20
      %s23 = sphi 0, %s21
      %s24 = sphi 0, %s22
      %s25 = sphi 0, %s23
      %s33 = sphi 0, %s33
      %s35 = sphi 0, %s33
      %s36 = sphi 0, %s35
      %s50 = sphi 0, %s36
      %s54 = sphi 0, %s54
      %s56 = sphi 0, %s54
      %s57 = sphi 0, %s56
      %s71 = sphi 0, %s57
      %s79 = sphi 0, %s81
      %s82 = sphi 0, %s79
      %s83 = sphi 0, %s82
      %s99 = sphi 0, %s83
      %s107 = sphi 0, %s109
      %s110 = sphi 0, %s107
      %s111 = sphi 0, %s110
      %s127 = sphi 0, %s111
    $region4: #{tpu_custom_call.1} parent=1 // loop_header_branch
      %16 = sbr.rel (%p14) target = $region8
    $region5: #{tpu_custom_call.1} parent=1 // loop_body
      %s18 = ssub.s32 %s13, 1
      %s19 = ssub.s32 %s13, 2
      %s26 = sadd.s32 1, %s21
      %p27 = scmp.ge.s32.totalorder %s26, 1
      %s28 = scalar_select %p27, 0, %s26
      %s29 = sadd.s32 1, %s20
      %s30 = scalar_select %p27, %s29, %s20
      %p31 = scmp.ge.s32.totalorder %s30, 2
      %s32 = scalar_select %p31, 0, %s30
      %s34 = sadd.s32 %s33, 1
      %p37 = scmp.eq.s32.totalorder %s13, 1
      %p38 = scmp.ne.s32.totalorder %s33, %s35
      %p39 = scmp.eq.s32.totalorder %s13, 0
      %p40 = por %p38, %p39
      %p41 = scmp.ne.s32.totalorder %s33, %s35
      %p42 = scmp.eq.s32.totalorder %s18, 1
      %p43 = por %p41, %p42
      %p44 = scmp.ne.s32.totalorder %s35, %s36
      %p45 = scmp.eq.s32.totalorder %s18, 0
      %p46 = por %p44, %p45
      %p47 = scmp.ne.s32.totalorder %s35, %s36
      %p48 = scmp.eq.s32.totalorder %s19, 1
      %p49 = por %p47, %p48
      %p51 = scmp.ne.s32.totalorder %s36, %s50
      %p52 = scmp.eq.s32.totalorder %s19, 0
      %p53 = por %p51, %p52
      %s55 = sadd.s32 %s54, 1
      %p58 = scmp.eq.s32.totalorder %s13, 1
      %p59 = scmp.ne.s32.totalorder %s54, %s56
      %p60 = scmp.eq.s32.totalorder %s13, 0
      %p61 = por %p59, %p60
      %p62 = scmp.ne.s32.totalorder %s54, %s56
      %p63 = scmp.eq.s32.totalorder %s18, 1
      %p64 = por %p62, %p63
      %p65 = scmp.ne.s32.totalorder %s56, %s57
      %p66 = scmp.eq.s32.totalorder %s18, 0
      %p67 = por %p65, %p66
      %p68 = scmp.ne.s32.totalorder %s56, %s57
      %p69 = scmp.eq.s32.totalorder %s19, 1
      %p70 = por %p68, %p69
      %p72 = scmp.ne.s32.totalorder %s57, %s71
      %p73 = scmp.eq.s32.totalorder %s19, 0
      %p74 = por %p72, %p73
      %s75 = ssub.s32 %s20, %s32
      %s76 = ssub.s32 %s21, %s28
      %s77 = sor.u32 %s75, %s76
      %p78 = scmp.eq.s32.totalorder %s77, 0
      %s80 = sadd.s32 %s79, 1
      %s81 = scalar_select %p78, %s79, %s80
      %p84 = pneg %p78
      %p85 = scmp.eq.s32.totalorder %s13, 1
      %p86 = por %p84, %p85
      %p87 = scmp.ne.s32.totalorder %s79, %s82
      %p88 = scmp.eq.s32.totalorder %s13, 0
      %p89 = por %p87, %p88
      %p90 = scmp.ne.s32.totalorder %s79, %s82
      %p91 = scmp.eq.s32.totalorder %s18, 1
      %p92 = por %p90, %p91
      %p93 = scmp.ne.s32.totalorder %s82, %s83
      %p94 = scmp.eq.s32.totalorder %s18, 0
      %p95 = por %p93, %p94
      %p96 = scmp.ne.s32.totalorder %s82, %s83
      %p97 = scmp.eq.s32.totalorder %s19, 1
      %p98 = por %p96, %p97
      %p100 = scmp.ne.s32.totalorder %s83, %s99
      %p101 = scmp.eq.s32.totalorder %s19, 0
      %p102 = por %p100, %p101
      %s103 = ssub.s32 %s20, %s32
      %s104 = ssub.s32 %s21, %s28
      %s105 = sor.u32 %s103, %s104
      %p106 = scmp.eq.s32.totalorder %s105, 0
      %s108 = sadd.s32 %s107, 1
      %s109 = scalar_select %p106, %s107, %s108
      %p112 = pneg %p106
      %p113 = scmp.eq.s32.totalorder %s13, 1
      %p114 = por %p112, %p113
      %p115 = scmp.ne.s32.totalorder %s107, %s110
      %p116 = scmp.eq.s32.totalorder %s13, 0
      %p117 = por %p115, %p116
      %p118 = scmp.ne.s32.totalorder %s107, %s110
      %p119 = scmp.eq.s32.totalorder %s18, 1
      %p120 = por %p118, %p119
      %p121 = scmp.ne.s32.totalorder %s110, %s111
      %p122 = scmp.eq.s32.totalorder %s18, 0
      %p123 = por %p121, %p122
      %p124 = scmp.ne.s32.totalorder %s110, %s111
      %p125 = scmp.eq.s32.totalorder %s19, 1
      %p126 = por %p124, %p125
      %p128 = scmp.ne.s32.totalorder %s111, %s127
      %p129 = scmp.eq.s32.totalorder %s19, 0
      %p130 = por %p128, %p129
      %p131 = scmp.le.s32.totalorder 1, %s13
      %p132 = scmp.lt.s32.totalorder %s13, 3
      %p133 = pnand %p131, %p132
      %p134 = pneg %p133
      // Predicated region
      $region9: #{tpu_custom_call.1} parent=5 // pred_check
        _
      $region10: #{tpu_custom_call.1} parent=5 // pred_check_branch
        %136 = sbr.rel (%p133) target = $region12
      $region11: #{tpu_custom_call.1} parent=5 // pred_region
        %s137 = ssub.s32 %s13, 1
        // Predicated region
        $region13: #{tpu_custom_call.1} parent=11 // pred_check
          %p138 = pneg %p46
        $region14: #{tpu_custom_call.1} parent=11 // pred_check_branch
          %140 = sbr.rel (%p138) target = $region16
        $region15: #{tpu_custom_call.1} parent=11 // pred_region
          %s142 = ssub.s32 16, 16
          %143 = vsyncadd [#allocation5], %s142
          %s145 = sshll.u32 %s0, 4
          %s146 = int_to_ptr.vmem [resolvable:$true] %s145
          %148 = dma.vmem_to_smem %s146, 16, [#allocation3], [#allocation5]
        $region16: #{tpu_custom_call.1} parent=11 // pred_fallthru
          _
        // Predicated region
        $region17: #{tpu_custom_call.1} parent=11 // pred_check
          %p149 = pneg %p67
        $region18: #{tpu_custom_call.1} parent=11 // pred_check_branch
          %151 = sbr.rel (%p149) target = $region20
        $region19: #{tpu_custom_call.1} parent=11 // pred_region
          _
        $region20: #{tpu_custom_call.1} parent=11 // pred_fallthru
          _
      $region12: #{tpu_custom_call.1} parent=5 // pred_fallthru
        _
      %p152 = scmp.lt.s32.totalorder %s13, 2
      // Predicated region
      $region21: #{tpu_custom_call.1} parent=5 // pred_check
        %p153 = pneg %p152
      $region22: #{tpu_custom_call.1} parent=5 // pred_check_branch
        %155 = sbr.rel (%p153) target = $region24
      $region23: #{tpu_custom_call.1} parent=5 // pred_region
        // Predicated region
        $region25: #{tpu_custom_call.1} parent=23 // pred_check
          %p156 = pneg %p89
        $region26: #{tpu_custom_call.1} parent=23 // pred_check_branch
          %158 = sbr.rel (%p156) target = $region28
        $region27: #{tpu_custom_call.1} parent=23 // pred_region
          %s159 = smul.u32 2, %s21
          %p160 = scmp.lt.s32.totalorder %s20, 1
          %s161 = scalar_select %p160, %s20, 1
          %p162 = scmp.lt.s32.totalorder %s159, 1
          %s163 = scalar_select %p162, %s159, 1
          %s164 = smul.addr %s161, 2
          %s165 = sadd.s32 %s163, %s164
          %s166 = smul.addr %s165, 4
          %s167 = scalar_lea.vmem %s2, %s166
          %s168 = smul.u32 2, %s21
        $region28: #{tpu_custom_call.1} parent=23 // pred_fallthru
          _
      $region24: #{tpu_custom_call.1} parent=5 // pred_fallthru
        _
      %p169 = scmp.le.s32.totalorder 1, %s13
      %p170 = scmp.lt.s32.totalorder %s13, 3
      %p171 = pnand %p169, %p170
      %p172 = pneg %p171
      // Predicated region
      $region29: #{tpu_custom_call.1} parent=5 // pred_check
        _
      $region30: #{tpu_custom_call.1} parent=5 // pred_check_branch
        %174 = sbr.rel (%p171) target = $region32
      $region31: #{tpu_custom_call.1} parent=5 // pred_region
        %s175 = ssub.s32 %s13, 1
        // Predicated region
        $region33: #{tpu_custom_call.1} parent=31 // pred_check
          %p176 = pneg %p46
        $region34: #{tpu_custom_call.1} parent=31 // pred_check_branch
          %178 = sbr.rel (%p176) target = $region36
        $region35: #{tpu_custom_call.1} parent=31 // pred_region
          %179 = dma.done [#allocation5], 16
        $region36: #{tpu_custom_call.1} parent=31 // pred_fallthru
          _
        %180 = sfence
        %p181 = pneg %p46
        %p182 = pneg %p43
        %p183 = pneg %p67
        %p184 = pneg %p64
        %s185 = smul.u32 2, %s23
        %p186 = scmp.lt.s32.totalorder %s22, 1
        %s187 = scalar_select %p186, %s22, 1
        %p188 = scmp.lt.s32.totalorder %s185, 1
        %s189 = scalar_select %p188, %s185, 1
        %s190 = smul.addr %s187, 2
        %s191 = sadd.s32 %s189, %s190
        %s192 = smul.addr %s191, 4
        %s193 = scalar_lea.vmem %s2, %s192
        %p194 = pneg %p95
        %p195 = pneg %p92
        %p196 = pneg %p123
        %p197 = pneg %p120
        %s198 = sand.u32 %s110, 1
        %s199 = scalar_lea.sflag [#allocation4], %s198
        %s200 = sand.u32 %s110, 1
        %s201 = smul.addr %s200, 16
        %s202 = scalar_lea.vmem [#allocation6], %s201
        %s203 = smul.u32 2, %s23
        %p204 = scmp.lt.s32.totalorder %s22, 1
        %s205 = scalar_select %p204, %s22, 1
        %p206 = scmp.lt.s32.totalorder %s203, 1
        %s207 = scalar_select %p206, %s203, 1
        %s208 = smul.addr %s205, 2
        %s209 = sadd.s32 %s207, %s208
        %s210 = smul.addr %s209, 4
        %s211 = scalar_lea.vmem %s2, %s210
        %s212 = smul.u32 2, %s23
        %s213 = smul.u32 2, %s23
        %p214 = scmp.eq.s32.totalorder %s23, 0
        // Predicated region
        $region37: #{tpu_custom_call.1} parent=31 // pred_check
          %p215 = pneg %p214
        $region38: #{tpu_custom_call.1} parent=31 // pred_check_branch
          %217 = sbr.rel (%p215) target = $region40
        $region39: #{tpu_custom_call.1} parent=31 // pred_region
          %v218 = vld [vmem:[%s1] sm:$0xff]
          %v219 = vld [vmem:[%s1 + $0x8] sm:$0xff]
          %v220 = vld [vmem:[%s1 + $0x10] sm:$0xff]
          %v221 = vld [vmem:[%s1 + $0x18] sm:$0xff]
          %s222 = smul.u32 %s22, 4
          %s223 = sld [smem:[#allocation3 + %s222]]
          %v224 = vstv %s223
          %v225 = vmul.f32 %v224, %v218
          %s226 = sadd.s32 %s222, 1
          %s227 = sld [smem:[#allocation3 + %s226]]
          %v228 = vstv %s227
          %v229 = vmul.f32 %v228, %v219
          %v230 = vadd.f32 %v225, %v229
          %s231 = sadd.s32 %s222, 2
          %s232 = sld [smem:[#allocation3 + %s231]]
          %v233 = vstv %s232
          %v234 = vmul.f32 %v233, %v220
          %v235 = vadd.f32 %v230, %v234
          %s236 = sadd.s32 %s222, 3
          %s237 = sld [smem:[#allocation3 + %s236]]
          %v238 = vstv %s237
          %v239 = vmul.f32 %v238, %v221
          %v240 = vadd.f32 %v235, %v239
          %vm241 = vcmask 31744
          %242 = vst.msk [vmem:[#allocation2] sm:$0xff] %vm241, %v240
        $region40: #{tpu_custom_call.1} parent=31 // pred_fallthru
          _
        %v243 = vld [vmem:[%s211] sm:$0xff]
        %v244 = vld [vmem:[#allocation2] sm:$0xff]
        %246 = vset.pattern.permute.xlu0 0
        %247 = vperm.xlu0 %246, %v244
        %v248 = vpop.permute.xlu0 %247
        %v251 = vlaneseq
        %v252 = vshrl.u32 %v251, 7
        %v253 = vsub.s32 0, %v252
        %v254 = vrot.slane %v243, %v253
        %v255 = vlaneseq
        %v256 = vshrl.u32 %v255, 7
        %v257 = vsub.s32 4, %v256
        %v258 = vrot.slane %v243, %v257
        %v261 = vlaneseq
        %v262 = vshrl.u32 %v261, 7
        %v263 = vsub.s32 0, %v262
        %v264 = vrot.slane %v254, %v263
        %v265 = vlaneseq
        %v266 = vshrl.u32 %v265, 7
        %v267 = vsub.s32 0, %v266
        %v268 = vrot.slane %v258, %v267
        %v269 = vmul.f32 %v248, %v264
        %v270 = vmul.f32 %v248, %v268
        %271 = vset.pattern.permute.xlu0 1
        %272 = vperm.xlu0 %271, %v244
        %v273 = vpop.permute.xlu0 %272
        %v275 = vlaneseq
        %v276 = vshrl.u32 %v275, 7
        %v277 = vsub.s32 1, %v276
        %v278 = vrot.slane %v243, %v277
        %v279 = vlaneseq
        %v280 = vshrl.u32 %v279, 7
        %v281 = vsub.s32 5, %v280
        %v282 = vrot.slane %v243, %v281
        %v285 = vlaneseq
        %v286 = vshrl.u32 %v285, 7
        %v287 = vsub.s32 1, %v286
        %v288 = vrot.slane %v278, %v287
        %v289 = vlaneseq
        %v290 = vshrl.u32 %v289, 7
        %v291 = vsub.s32 1, %v290
        %v292 = vrot.slane %v282, %v291
        %v293 = vmul.f32 %v273, %v288
        %v294 = vmul.f32 %v273, %v292
        %v295 = vadd.f32 %v269, %v293
        %v296 = vadd.f32 %v270, %v294
        %297 = vset.pattern.permute.xlu0 2
        %298 = vperm.xlu0 %297, %v244
        %v299 = vpop.permute.xlu0 %298
        %v301 = vlaneseq
        %v302 = vshrl.u32 %v301, 7
        %v303 = vsub.s32 2, %v302
        %v304 = vrot.slane %v243, %v303
        %v305 = vlaneseq
        %v306 = vshrl.u32 %v305, 7
        %v307 = vsub.s32 6, %v306
        %v308 = vrot.slane %v243, %v307
        %v311 = vlaneseq
        %v312 = vshrl.u32 %v311, 7
        %v313 = vsub.s32 2, %v312
        %v314 = vrot.slane %v304, %v313
        %v315 = vlaneseq
        %v316 = vshrl.u32 %v315, 7
        %v317 = vsub.s32 2, %v316
        %v318 = vrot.slane %v308, %v317
        %v319 = vmul.f32 %v299, %v314
        %v320 = vmul.f32 %v299, %v318
        %v321 = vadd.f32 %v295, %v319
        %v322 = vadd.f32 %v296, %v320
        %323 = vset.pattern.permute.xlu0 3
        %324 = vperm.xlu0 %323, %v244
        %v325 = vpop.permute.xlu0 %324
        %v327 = vlaneseq
        %v328 = vshrl.u32 %v327, 7
        %v329 = vsub.s32 3, %v328
        %v330 = vrot.slane %v243, %v329
        %v331 = vlaneseq
        %v332 = vshrl.u32 %v331, 7
        %v333 = vsub.s32 7, %v332
        %v334 = vrot.slane %v243, %v333
        %v337 = vlaneseq
        %v338 = vshrl.u32 %v337, 7
        %v339 = vsub.s32 3, %v338
        %v340 = vrot.slane %v330, %v339
        %v341 = vlaneseq
        %v342 = vshrl.u32 %v341, 7
        %v343 = vsub.s32 3, %v342
        %v344 = vrot.slane %v334, %v343
        %v345 = vmul.f32 %v325, %v340
        %v346 = vmul.f32 %v325, %v344
        %v347 = vadd.f32 %v321, %v345
        %v348 = vadd.f32 %v322, %v346
        %349 = vst [vmem:[%s202] sm:$0xff] %v347
        %350 = vst [vmem:[%s202 + $0x8] sm:$0xff] %v348
        %s351 = sand.u32 %s110, 1
        %s352 = scalar_lea.sflag [#allocation4], %s351
        %s353 = sand.u32 %s110, 1
        %s354 = smul.addr %s353, 16
        %s355 = scalar_lea.vmem [#allocation6], %s354
        // Predicated region
        $region41: #{tpu_custom_call.1} parent=31 // pred_check
          %p356 = pneg %p120
        $region42: #{tpu_custom_call.1} parent=31 // pred_check_branch
          %358 = sbr.rel (%p356) target = $region44
        $region43: #{tpu_custom_call.1} parent=31 // pred_region
          %s359 = smul.u32 2, %s23
          %s361 = ssub.s32 256, 256
          %362 = vsyncadd %s352, %s361
          %s363 = smul.addr %s22, 2
          %s364 = sadd.s32 %s359, %s363
          %s365 = smul.addr %s364, 128
          %s366 = scalar_lea.hbm %s3, %s365
          %s368 = sshll.u32 %s355, 4
          %s369 = int_to_ptr.vmem [resolvable:$true] %s368
          %371 = dma.vmem_to_hbm [thread:$0]  %s369, 256, %s366, %s352
        $region44: #{tpu_custom_call.1} parent=31 // pred_fallthru
          _
      $region32: #{tpu_custom_call.1} parent=5 // pred_fallthru
        _
      %p372 = scmp.le.s32.totalorder 2, %s13
      // Predicated region
      $region45: #{tpu_custom_call.1} parent=5 // pred_check
        %p373 = pneg %p372
      $region46: #{tpu_custom_call.1} parent=5 // pred_check_branch
        %375 = sbr.rel (%p373) target = $region48
      $region47: #{tpu_custom_call.1} parent=5 // pred_region
        %s376 = ssub.s32 %s13, 2
        // Predicated region
        $region49: #{tpu_custom_call.1} parent=47 // pred_check
          %p377 = pneg %p126
        $region50: #{tpu_custom_call.1} parent=47 // pred_check_branch
          %379 = sbr.rel (%p377) target = $region52
        $region51: #{tpu_custom_call.1} parent=47 // pred_region
          %s380 = sand.u32 %s111, 1
          %s381 = scalar_lea.sflag [#allocation4], %s380
          %s382 = sand.u32 %s111, 1
          %s383 = smul.addr %s382, 16
          %s384 = scalar_lea.vmem [#allocation6], %s383
          %385 = dma.done %s381, 256
        $region52: #{tpu_custom_call.1} parent=47 // pred_fallthru
          _
      $region48: #{tpu_custom_call.1} parent=5 // pred_fallthru
        _
    $region6: #{tpu_custom_call.1} parent=1 // loop_footer
      %s17 = sadd.s32 1, %s13
    $region7: #{tpu_custom_call.1} parent=1 // loop_footer_branch
      %12 = sbr.rel target = $region3
    $region8: #{tpu_custom_call.1} parent=1 // loop_exit
      _
    %386 = vsyncpa [#allocation4], 1
    %s387 = scalar_lea.sflag [#allocation4], 1
    %388 = vsyncpa %s387, 1
    %389 = vsyncpa [#allocation5], 1
    %s390 = scalar_lea.sflag [#allocation5], 1
    %391 = vsyncpa %s390, 1

</llo_original>
